<compile_context>
chip_gen: v5e
topology: v5e:2x2
jax: 0.10.0
libtpu: 0.0.40
codegen_flags: <defaults>
</compile_context>

<pallas_src>
import functools

import jax
import jax.numpy as jnp
from jax import lax
from jax.experimental import pallas as pl
from jax.experimental.pallas import tpu as pltpu


# ------------------------------ Fused kernel ----------------------------------
def _prompt_kernel(x_ref, wd_ref, wu_ref, pk_ref, o_ref, *, eps):
    # x_ref : (B, S, D)
    # wd_ref: (D, Dd)                 proj_down weight (stored as (in, out))
    # wu_ref: (Dd, PD)                proj_up weight   (stored as (in, out))
    # pk_ref: (3, PD)  row0 = gamma (padded), row1 = beta (padded), row2 = b_up
    # o_ref : (B, PD)
    B = x_ref.shape[0]
    Dd = wd_ref.shape[1]
    PD = wu_ref.shape[1]

    x = x_ref[...]

    # 1) AdaptiveAvgPool1d(1) over the sequence axis -> (B, D)   (sublane reduce)
    pooled = jnp.mean(x, axis=1)

    # 2) proj_down (single small MXU matmul, f32 accumulation).
    #    b_down is intentionally dropped: training-mode BatchNorm subtracts the
    #    per-channel batch mean, so a constant per-channel bias cancels exactly.
    h = jnp.dot(pooled, wd_ref[...], preferred_element_type=jnp.float32)  # (B, Dd)

    # 3+4) BatchNorm1d (training-mode batch stats, biased variance) + ReLU,
    #      with the affine folded into one scale/shift on the critical chain.
    mean = jnp.mean(h, axis=0, keepdims=True)                      # (1, Dd)
    var = jnp.mean((h - mean) ** 2, axis=0, keepdims=True)         # (1, Dd)
    gamma = pk_ref[0:1, :Dd]                                       # (1, Dd)
    beta = pk_ref[1:2, :Dd]                                        # (1, Dd)
    scale = gamma * lax.rsqrt(var + eps)                           # EUP rsqrt
    shift = beta - mean * scale
    y = jnp.maximum(h * scale + shift, 0.0)                        # (B, Dd)

    # 5) Dropout(0.2)
    # TODO(synk): nn.Dropout(0.2) is applied as identity (eval-mode); training-time
    #             random masking + 1/0.8 scaling is intentionally not reproduced.

    # 6) proj_up as K=Dd unrolled VPU broadcast multiply-adds into the lane-dense
    #    (B, PD) output vreg (MXU push/drain latency exceeds ~Dd VPU ops here).
    wu = wu_ref[...]                                               # (Dd, PD)
    b_up = pk_ref[2:3, :]                                          # (1, PD)
    out = b_up + y[:, 0:1] * wu[0:1, :]                            # (B, PD)
    for k in range(1, Dd):
        out = out + y[:, k:k + 1] * wu[k:k + 1, :]
    o_ref[...] = out


# -------------------------------- Wrapper --------------------------------------
def prompt_generator_forward(x, params, num_prompts, eps=1e-5):
    B, S, D = x.shape
    Dd = params["w_down"].shape[1]
    PD = params["w_up"].shape[1]  # == num_prompts * D

    # Pack the tiny per-channel params into ONE buffer -> single DMA, one VMEM tile.
    packed = jnp.zeros((3, PD), dtype=jnp.float32)
    packed = packed.at[0, :Dd].set(params["gamma"].reshape(-1))
    packed = packed.at[1, :Dd].set(params["beta"].reshape(-1))
    packed = packed.at[2, :].set(params["b_up"].reshape(-1))

    # Advisory cost hint so XLA schedules sensibly around the tiny custom call.
    flops = B * S * D + 2 * B * D * Dd + 2 * B * Dd * PD
    bytes_accessed = 4 * (B * S * D + D * Dd + Dd * PD + 3 * PD + B * PD)
    cost = pl.CostEstimate(flops=flops, transcendentals=2 * Dd,
                           bytes_accessed=bytes_accessed)

    vmem = pltpu.MemorySpace.VMEM
    out2d = pl.pallas_call(
        functools.partial(_prompt_kernel, eps=eps),
        out_shape=jax.ShapeDtypeStruct((B, PD), jnp.float32),
        # No grid: single invocation, whole arrays resident in VMEM,
        # no double-buffered pipeline prologue/epilogue.
        in_specs=[
            pl.BlockSpec(memory_space=vmem),   # x
            pl.BlockSpec(memory_space=vmem),   # w_down
            pl.BlockSpec(memory_space=vmem),   # w_up
            pl.BlockSpec(memory_space=vmem),   # packed (gamma | beta | b_up)
        ],
        out_specs=pl.BlockSpec(memory_space=vmem),
        cost_estimate=cost,
    )(x, params["w_down"], params["w_up"], packed)

    # view(B, num_prompts, -1): metadata-only reshape in the wrapper.
    return out2d.reshape(B, num_prompts, D)


# --------------------------- Pure-JAX reference ---------------------------------
def reference_forward(x, params, num_prompts, eps=1e-5):
    # Full original semantics (including b_down, which cancels under training BN).
    B, S, D = x.shape
    pooled = jnp.mean(x, axis=1)                                  # (B, D)
    h = pooled @ params["w_down"] + params["b_down"][0]           # (B, Dd)
    mean = jnp.mean(h, axis=0, keepdims=True)
    var = jnp.mean((h - mean) ** 2, axis=0, keepdims=True)
    y = (h - mean) / jnp.sqrt(var + eps)
    y = y * params["gamma"][0] + params["beta"][0]
    y = jnp.maximum(y, 0.0)
    out = y @ params["w_up"] + params["b_up"][0]                  # (B, P*D)
    return out.reshape(B, num_prompts, D)


# ---------------------------------- Main ----------------------------------------
if __name__ == "__main__":
    # Module hyperparameters: input=D=32, downsize=4 -> Dd=8, prompt=P=4.
    # Data: B=2, S=16.  proj_up output dim = P*D = 128 (lane-dense).
    B, S, D = 2, 16, 32
    downsize = 4
    num_prompts = 4
    Dd = D // downsize
    PD = num_prompts * D

    key = jax.random.PRNGKey(0)
    kx, kwd, kbd, kwu, kbu, kg, kb = jax.random.split(key, 7)

    x = jax.random.normal(kx, (B, S, D), dtype=jnp.float32)

    # Deterministic synthetic parameters (shapes per nn.Linear / nn.BatchNorm1d).
    # Linear weights stored already-transposed as (in, out) so forward is x @ W.
    params = {
        "w_down": jax.random.normal(kwd, (D, Dd), dtype=jnp.float32) * 0.1,
        "b_down": jax.random.normal(kbd, (1, Dd), dtype=jnp.float32) * 0.1,
        "w_up":   jax.random.normal(kwu, (Dd, PD), dtype=jnp.float32) * 0.1,
        "b_up":   jax.random.normal(kbu, (1, PD), dtype=jnp.float32) * 0.1,
        "gamma":  jnp.ones((1, Dd), dtype=jnp.float32)
                  + 0.1 * jax.random.normal(kg, (1, Dd), dtype=jnp.float32),
        "beta":   0.1 * jax.random.normal(kb, (1, Dd), dtype=jnp.float32),
    }

    out = prompt_generator_forward(x, params, num_prompts)
    out = jax.block_until_ready(out)

    ref = reference_forward(x, params, num_prompts)
    assert out.shape == (B, num_prompts, D), out.shape
    assert jnp.allclose(out, ref, atol=1e-4, rtol=1e-4), float(jnp.max(jnp.abs(out - ref)))

    print("KERNEL_OK")
</pallas_src>

<mosaic_0001>
module attributes {stable_mosaic.version = 11 : i64} {
  func.func @_prompt_kernel(%arg0: memref<2x16x32xf32, #tpu.memory_space<vmem>>, %arg1: memref<32x8xf32, #tpu.memory_space<vmem>>, %arg2: memref<8x128xf32, #tpu.memory_space<vmem>>, %arg3: memref<3x128xf32, #tpu.memory_space<vmem>>, %arg4: memref<2x128xf32, #tpu.memory_space<vmem>>) attributes {dimension_semantics = [], scalar_prefetch = 0 : i64, scratch_operands = 0 : i64, tpu.core_type = #tpu.core_type<tc>} {
    %c0 = arith.constant 0 : index
    %c0_0 = arith.constant 0 : index
    %c0_1 = arith.constant 0 : index
    %0 = vector.load %arg0[%c0, %c0_0, %c0_1] : memref<2x16x32xf32, #tpu.memory_space<vmem>>, vector<2x16x32xf32>
    %cst = arith.constant dense<0.000000e+00> : vector<2x32xf32>
    %1 = vector.multi_reduction <add>, %0, %cst [1] : vector<2x16x32xf32> to vector<2x32xf32>
    %cst_2 = arith.constant 1.600000e+01 : f32
    %2 = vector.broadcast %cst_2 : f32 to vector<2x32xf32>
    %3 = arith.divf %1, %2 : vector<2x32xf32>
    %c0_3 = arith.constant 0 : index
    %c0_4 = arith.constant 0 : index
    %4 = vector.load %arg1[%c0_3, %c0_4] : memref<32x8xf32, #tpu.memory_space<vmem>>, vector<32x8xf32>
    %cst_5 = arith.constant dense<0.000000e+00> : vector<2x8xf32>
    %5 = tpu.matmul %3, %4, %cst_5 {dimension_numbers = #tpu.dot_dimension_numbers<[1], [0], [0], [1], [0, 0, 1, 1], [], []>} : vector<2x32xf32>, vector<32x8xf32>, vector<2x8xf32> -> vector<2x8xf32>
    %cst_6 = arith.constant dense<0.000000e+00> : vector<8xf32>
    %6 = vector.multi_reduction <add>, %5, %cst_6 [0] : vector<2x8xf32> to vector<8xf32>
    %7 = vector.shape_cast %6 : vector<8xf32> to vector<1x8xf32>
    %cst_7 = arith.constant 2.000000e+00 : f32
    %8 = vector.broadcast %cst_7 : f32 to vector<1x8xf32>
    %9 = arith.divf %7, %8 : vector<1x8xf32>
    %10 = vector.broadcast %9 : vector<1x8xf32> to vector<2x8xf32>
    %11 = arith.subf %5, %10 : vector<2x8xf32>
    %12 = arith.mulf %11, %11 : vector<2x8xf32>
    %cst_8 = arith.constant dense<0.000000e+00> : vector<8xf32>
    %13 = vector.multi_reduction <add>, %12, %cst_8 [0] : vector<2x8xf32> to vector<8xf32>
    %14 = vector.shape_cast %13 : vector<8xf32> to vector<1x8xf32>
    %cst_9 = arith.constant 2.000000e+00 : f32
    %15 = vector.broadcast %cst_9 : f32 to vector<1x8xf32>
    %16 = arith.divf %14, %15 : vector<1x8xf32>
    %c0_10 = arith.constant 0 : index
    %c0_11 = arith.constant 0 : index
    %17 = vector.load %arg3[%c0_10, %c0_11] : memref<3x128xf32, #tpu.memory_space<vmem>>, vector<1x8xf32>
    %c1 = arith.constant 1 : index
    %c0_12 = arith.constant 0 : index
    %18 = vector.load %arg3[%c1, %c0_12] : memref<3x128xf32, #tpu.memory_space<vmem>>, vector<1x8xf32>
    %cst_13 = arith.constant 9.99999974E-6 : f32
    %19 = vector.broadcast %cst_13 : f32 to vector<1x8xf32>
    %20 = arith.addf %16, %19 : vector<1x8xf32>
    %21 = math.rsqrt %20 : vector<1x8xf32>
    %22 = arith.mulf %17, %21 : vector<1x8xf32>
    %23 = arith.mulf %9, %22 : vector<1x8xf32>
    %24 = arith.subf %18, %23 : vector<1x8xf32>
    %25 = vector.broadcast %22 : vector<1x8xf32> to vector<2x8xf32>
    %26 = arith.mulf %5, %25 : vector<2x8xf32>
    %27 = vector.broadcast %24 : vector<1x8xf32> to vector<2x8xf32>
    %28 = arith.addf %26, %27 : vector<2x8xf32>
    %cst_14 = arith.constant 0.000000e+00 : f32
    %29 = vector.broadcast %cst_14 : f32 to vector<2x8xf32>
    %30 = arith.maximumf %28, %29 : vector<2x8xf32>
    %c0_15 = arith.constant 0 : index
    %c0_16 = arith.constant 0 : index
    %31 = vector.load %arg2[%c0_15, %c0_16] : memref<8x128xf32, #tpu.memory_space<vmem>>, vector<8x128xf32>
    %c2 = arith.constant 2 : index
    %c0_17 = arith.constant 0 : index
    %32 = vector.load %arg3[%c2, %c0_17] : memref<3x128xf32, #tpu.memory_space<vmem>>, vector<1x128xf32>
    %33 = vector.extract_strided_slice %30 {offsets = [0, 0], sizes = [2, 1], strides = [1, 1]} : vector<2x8xf32> to vector<2x1xf32>
    %34 = vector.extract_strided_slice %31 {offsets = [0, 0], sizes = [1, 128], strides = [1, 1]} : vector<8x128xf32> to vector<1x128xf32>
    %35 = vector.broadcast %33 : vector<2x1xf32> to vector<2x128xf32>
    %36 = vector.broadcast %34 : vector<1x128xf32> to vector<2x128xf32>
    %37 = arith.mulf %35, %36 : vector<2x128xf32>
    %38 = vector.broadcast %32 : vector<1x128xf32> to vector<2x128xf32>
    %39 = arith.addf %38, %37 : vector<2x128xf32>
    %40 = vector.extract_strided_slice %30 {offsets = [0, 1], sizes = [2, 1], strides = [1, 1]} : vector<2x8xf32> to vector<2x1xf32>
    %41 = vector.extract_strided_slice %31 {offsets = [1, 0], sizes = [1, 128], strides = [1, 1]} : vector<8x128xf32> to vector<1x128xf32>
    %42 = vector.broadcast %40 : vector<2x1xf32> to vector<2x128xf32>
    %43 = vector.broadcast %41 : vector<1x128xf32> to vector<2x128xf32>
    %44 = arith.mulf %42, %43 : vector<2x128xf32>
    %45 = arith.addf %39, %44 : vector<2x128xf32>
    %46 = vector.extract_strided_slice %30 {offsets = [0, 2], sizes = [2, 1], strides = [1, 1]} : vector<2x8xf32> to vector<2x1xf32>
    %47 = vector.extract_strided_slice %31 {offsets = [2, 0], sizes = [1, 128], strides = [1, 1]} : vector<8x128xf32> to vector<1x128xf32>
    %48 = vector.broadcast %46 : vector<2x1xf32> to vector<2x128xf32>
    %49 = vector.broadcast %47 : vector<1x128xf32> to vector<2x128xf32>
    %50 = arith.mulf %48, %49 : vector<2x128xf32>
    %51 = arith.addf %45, %50 : vector<2x128xf32>
    %52 = vector.extract_strided_slice %30 {offsets = [0, 3], sizes = [2, 1], strides = [1, 1]} : vector<2x8xf32> to vector<2x1xf32>
    %53 = vector.extract_strided_slice %31 {offsets = [3, 0], sizes = [1, 128], strides = [1, 1]} : vector<8x128xf32> to vector<1x128xf32>
    %54 = vector.broadcast %52 : vector<2x1xf32> to vector<2x128xf32>
    %55 = vector.broadcast %53 : vector<1x128xf32> to vector<2x128xf32>
    %56 = arith.mulf %54, %55 : vector<2x128xf32>
    %57 = arith.addf %51, %56 : vector<2x128xf32>
    %58 = vector.extract_strided_slice %30 {offsets = [0, 4], sizes = [2, 1], strides = [1, 1]} : vector<2x8xf32> to vector<2x1xf32>
    %59 = vector.extract_strided_slice %31 {offsets = [4, 0], sizes = [1, 128], strides = [1, 1]} : vector<8x128xf32> to vector<1x128xf32>
    %60 = vector.broadcast %58 : vector<2x1xf32> to vector<2x128xf32>
    %61 = vector.broadcast %59 : vector<1x128xf32> to vector<2x128xf32>
    %62 = arith.mulf %60, %61 : vector<2x128xf32>
    %63 = arith.addf %57, %62 : vector<2x128xf32>
    %64 = vector.extract_strided_slice %30 {offsets = [0, 5], sizes = [2, 1], strides = [1, 1]} : vector<2x8xf32> to vector<2x1xf32>
    %65 = vector.extract_strided_slice %31 {offsets = [5, 0], sizes = [1, 128], strides = [1, 1]} : vector<8x128xf32> to vector<1x128xf32>
    %66 = vector.broadcast %64 : vector<2x1xf32> to vector<2x128xf32>
    %67 = vector.broadcast %65 : vector<1x128xf32> to vector<2x128xf32>
    %68 = arith.mulf %66, %67 : vector<2x128xf32>
    %69 = arith.addf %63, %68 : vector<2x128xf32>
    %70 = vector.extract_strided_slice %30 {offsets = [0, 6], sizes = [2, 1], strides = [1, 1]} : vector<2x8xf32> to vector<2x1xf32>
    %71 = vector.extract_strided_slice %31 {offsets = [6, 0], sizes = [1, 128], strides = [1, 1]} : vector<8x128xf32> to vector<1x128xf32>
    %72 = vector.broadcast %70 : vector<2x1xf32> to vector<2x128xf32>
    %73 = vector.broadcast %71 : vector<1x128xf32> to vector<2x128xf32>
    %74 = arith.mulf %72, %73 : vector<2x128xf32>
    %75 = arith.addf %69, %74 : vector<2x128xf32>
    %76 = vector.extract_strided_slice %30 {offsets = [0, 7], sizes = [2, 1], strides = [1, 1]} : vector<2x8xf32> to vector<2x1xf32>
    %77 = vector.extract_strided_slice %31 {offsets = [7, 0], sizes = [1, 128], strides = [1, 1]} : vector<8x128xf32> to vector<1x128xf32>
    %78 = vector.broadcast %76 : vector<2x1xf32> to vector<2x128xf32>
    %79 = vector.broadcast %77 : vector<1x128xf32> to vector<2x128xf32>
    %80 = arith.mulf %78, %79 : vector<2x128xf32>
    %81 = arith.addf %75, %80 : vector<2x128xf32>
    %c0_18 = arith.constant 0 : index
    %c0_19 = arith.constant 0 : index
    %82 = vector.load %arg4[%c0_18, %c0_19] : memref<2x128xf32, #tpu.memory_space<vmem>>, vector<2x128xf32>
    tpu.vector_store %arg4[%c0_18, %c0_19], %81 {strides = array<i32>} : memref<2x128xf32, #tpu.memory_space<vmem>>, vector<2x128xf32>,
    return
  }
}

</mosaic_0001>

<llo_original>
// kernel: tpu_custom_call.1
$region0: #{tpu_custom_call.1}
  #allocation0 [shape = 'u32[]', space=smem, size = 0x4, offset = 0x4, fixed_abs, tag = 'smem constant byte address 0x4 - core index']
  #allocation1 [shape = 'u32[72,128]{1,0:T(1,128)}', space=vmem, size = 0x9000, scoped, tag = 'internal scratch']
  %s0 = inlined_call_operand.vmem [shape: f32[2,16,32], index: 0, kind: input, shape index: {}]
  %s1 = inlined_call_operand.vmem [shape: f32[32,8], index: 1, kind: input, shape index: {}]
  %s2 = inlined_call_operand.vmem [shape: f32[8,128], index: 2, kind: input, shape index: {}]
  %s3 = inlined_call_operand.hbm [shape: f32[3,128], index: 3, kind: input, shape index: {}]
  %s4 = inlined_call_operand.hbm [shape: f32[2,128], index: 4, kind: output, shape index: {}]
  %s5 = sld [smem:[#allocation0]]
  $region30: #{tpu_custom_call.1} parent=0
    _
  %s7 = ssub.s32 1, %s5
  %s8 = scalar_select 0, %s7, %s5
  $region1: #{tpu_custom_call.1} parent=0
    #allocation2 [shape = 'u8[2048]{0}', space=vmem, size = 0x800, scoped, tag = 'input window, operand 3, single buffered']
    #allocation3 [shape = 's32[1]{0}', space=sflag, size = 0x4, scoped, tag = 'scoped memory for tpu_custom_call.1']
    #allocation4 [shape = 's32[1]{0}', space=sflag, size = 0x4, scoped, tag = 'scoped memory for tpu_custom_call.1']
    #allocation5 [shape = 'u8[1024]{0}', space=vmem, size = 0x400, scoped, tag = 'output window, operand 0, single buffered']
    %9 = vsyncpa [#allocation3], 0
    %10 = vsyncpa [#allocation4], 0
    // Predicated region
    $region2: #{tpu_custom_call.1} parent=1 // pred_check
      _
    $region3: #{tpu_custom_call.1} parent=1 // pred_check_branch
      %12 = sbr.rel (0) target = $region5
    $region4: #{tpu_custom_call.1} parent=1 // pred_region
      _
    $region5: #{tpu_custom_call.1} parent=1 // pred_fallthru
      _
    // Predicated region
    $region6: #{tpu_custom_call.1} parent=1 // pred_check
      _
    $region7: #{tpu_custom_call.1} parent=1 // pred_check_branch
      %14 = sbr.rel (0) target = $region9
    $region8: #{tpu_custom_call.1} parent=1 // pred_region
      _
    $region9: #{tpu_custom_call.1} parent=1 // pred_fallthru
      _
    // Predicated region
    $region10: #{tpu_custom_call.1} parent=1 // pred_check
      _
    $region11: #{tpu_custom_call.1} parent=1 // pred_check_branch
      %16 = sbr.rel (0) target = $region13
    $region12: #{tpu_custom_call.1} parent=1 // pred_region
      _
    $region13: #{tpu_custom_call.1} parent=1 // pred_fallthru
      _
    // Predicated region
    $region14: #{tpu_custom_call.1} parent=1 // pred_check
      _
    $region15: #{tpu_custom_call.1} parent=1 // pred_check_branch
      %18 = sbr.rel (0) target = $region17
    $region16: #{tpu_custom_call.1} parent=1 // pred_region
      %20 = vsyncadd [#allocation3], 0
      %s22 = sshll.u32 %s3, 4
      %s23 = int_to_ptr.hbm [resolvable:$true] %s22
      %s24 = sshll.u32 [#allocation2], 4
      %s25 = int_to_ptr.vmem [resolvable:$true] %s24
      %27 = dma.hbm_to_vmem [thread:$0]  %s23, 64, %s25, [#allocation3]
    $region17: #{tpu_custom_call.1} parent=1 // pred_fallthru
      _
    // Predicated region
    $region18: #{tpu_custom_call.1} parent=1 // pred_check
      _
    $region19: #{tpu_custom_call.1} parent=1 // pred_check_branch
      %29 = sbr.rel (0) target = $region21
    $region20: #{tpu_custom_call.1} parent=1 // pred_region
      %31 = dma.done [#allocation3], 64
    $region21: #{tpu_custom_call.1} parent=1 // pred_fallthru
      _
    %v32 = vld [vmem:[%s0] sm:$0xff]
    %v33 = vld [vmem:[%s0 + $0x8] sm:$0xff]
    %v34 = vld [vmem:[%s0 + $0x10] sm:$0xff]
    %v35 = vld [vmem:[%s0 + $0x18] sm:$0xff]
    %vm36 = vcmask 261120
    %v37 = vsel %vm36, %v32, 0.0
    %v38 = vsel %vm36, %v33, 0.0
    %v39 = vadd.f32 %v37, %v38
    %v40 = vrot.slane %v39, 4
    %v41 = vadd.f32 %v39, %v40
    %v42 = vrot.slane %v41, 2
    %v43 = vadd.f32 %v41, %v42
    %v44 = vrot.slane %v43, 1
    %v45 = vadd.f32 %v43, %v44
    %v46 = vsel %vm36, %v34, 0.0
    %v47 = vsel %vm36, %v35, 0.0
    %v48 = vadd.f32 %v46, %v47
    %v49 = vrot.slane %v48, 4
    %v50 = vadd.f32 %v48, %v49
    %v51 = vrot.slane %v50, 2
    %v52 = vadd.f32 %v50, %v51
    %v53 = vrot.slane %v52, 1
    %v54 = vadd.f32 %v52, %v53
    %v55 = vrcp.pop 16.0
    %v56 = vmul.f32 16.0, %v55
    %v57 = vsub.f32 1.0, %v56
    %v58 = vmul.f32 %v55, %v57
    %v59 = vadd.f32 %v55, %v58
    %vm60 = vweird.f32 %v55
    %v61 = vsel %vm60, %v55, %v59
    %v62 = vmul.f32 %v45, %v61
    %v63 = vmul.f32 %v54, %v61
    %v64 = vld [vmem:[%s1] sm:$0xff]
    %v65 = vld [vmem:[%s1 + $0x8] sm:$0xff]
    %v66 = vld [vmem:[%s1 + $0x10] sm:$0xff]
    %v67 = vld [vmem:[%s1 + $0x18] sm:$0xff]
    %vm70 = vcmask 1041409
    %v71 = vsel %vm70, %v63, %v62
    %v72 = vsel %vm36, %v71, 0
    %74 = vmatpush.msra.mxu0 0.0
    %75 = vmatpush.msra.mxu0 0.0
    %76 = vmatpush.msra.mxu0 0.0
    %77 = vmatpush.msra.mxu0 0.0
    %78 = vmatpush.msra.mxu0 0.0
    %79 = vmatpush.msra.mxu0 0.0
    %80 = vmatpush.msra.mxu0 0.0
    %81 = vmatpush.msra.mxu0 0.0
    %82 = vmatpush.msra.mxu0 0.0
    %83 = vmatpush.msra.mxu0 0.0
    %84 = vmatpush.msra.mxu0 0.0
    %85 = vmatpush.msra.mxu0 0.0
    %86 = vmatpush.msra.mxu0 %v67
    %87 = vmatpush.msra.mxu0 %v66
    %88 = vmatpush.msra.mxu0 %v65
    %89 = vmatpush.msra.mxu0 %v64
    %90 = vmatmul.f32.gmra.mxu0 %v72
    %v91 = vpop.f32.mrf.mxu0
    %v92 = vadd.f32 0.0, %v91
    %93 = vdwg.mxu0
    %vm94 = vcmask 58368
    %v95 = vsel %vm94, %v92, 0.0
    %v96 = vrot.slane %v95, 4
    %v97 = vadd.f32 %v95, %v96
    %v98 = vrot.slane %v97, 2
    %v99 = vadd.f32 %v97, %v98
    %v100 = vrot.slane %v99, 1
    %v101 = vadd.f32 %v99, %v100
    %v102 = vrcp.pop 2.0
    %v103 = vmul.f32 2.0, %v102
    %v104 = vsub.f32 1.0, %v103
    %v105 = vmul.f32 %v102, %v104
    %v106 = vadd.f32 %v102, %v105
    %vm107 = vweird.f32 %v102
    %v108 = vsel %vm107, %v102, %v106
    %v109 = vmul.f32 %v101, %v108
    %v110 = vsub.f32 %v92, %v109
    %v111 = vmul.f32 %v110, %v110
    %v112 = vsel %vm94, %v111, 0.0
    %v113 = vrot.slane %v112, 4
    %v114 = vadd.f32 %v112, %v113
    %v115 = vrot.slane %v114, 2
    %v116 = vadd.f32 %v114, %v115
    %v117 = vrot.slane %v116, 1
    %v118 = vadd.f32 %v116, %v117
    %v119 = vmul.f32 %v118, %v108
    %v120 = vld [vmem:[#allocation2] sm:$0x1]
    %v121 = vld [vmem:[#allocation2 + $0x1] sm:$0x1]
    %v122 = vadd.f32 %v119, 1e-05
    %v123 = vrsqrt.pop %v122
    %v124 = vmul.f32 %v123, %v122
    %v125 = vmul.f32 %v124, %v123
    %v126 = vmul.f32 0.5, %v125
    %v127 = vsub.f32 1.5, %v126
    %v128 = vmul.f32 %v123, %v127
    %vm129 = vweird.f32 %v122
    %vm130 = vweird.f32 %v123
    %vm131 = vmor %vm129, %vm130
    %v132 = vsel %vm131, %v123, %v128
    %v133 = vmul.f32 %v120, %v132
    %v134 = vmul.f32 %v109, %v133
    %v135 = vsub.f32 %v121, %v134
    %v136 = vperm.slane %v133, 0
    %v137 = vmul.f32 %v92, %v136
    %v138 = vperm.slane %v135, 0
    %v139 = vadd.f32 %v137, %v138
    %v140 = vmax.f32 %v139, 0.0
    %v141 = vld [vmem:[%s2] sm:$0xff]
    %v142 = vld [vmem:[#allocation2 + $0x2] sm:$0x1]
    %144 = vset.pattern.permute.xlu0 0
    %145 = vperm.xlu0 %144, %v140
    %v146 = vpop.permute.xlu0 %145
    %v148 = vperm.slane %v141, 0
    %v149 = vmul.f32 %v146, %v148
    %v150 = vperm.slane %v142, 0
    %v151 = vadd.f32 %v150, %v149
    %152 = vset.pattern.permute.xlu0 1
    %153 = vperm.xlu0 %152, %v140
    %v154 = vpop.permute.xlu0 %153
    %v156 = vperm.slane %v141, 1
    %v157 = vmul.f32 %v154, %v156
    %v158 = vadd.f32 %v151, %v157
    %159 = vset.pattern.permute.xlu0 2
    %160 = vperm.xlu0 %159, %v140
    %v161 = vpop.permute.xlu0 %160
    %v163 = vperm.slane %v141, 2
    %v164 = vmul.f32 %v161, %v163
    %v165 = vadd.f32 %v158, %v164
    %166 = vset.pattern.permute.xlu0 3
    %167 = vperm.xlu0 %166, %v140
    %v168 = vpop.permute.xlu0 %167
    %v170 = vperm.slane %v141, 3
    %v171 = vmul.f32 %v168, %v170
    %v172 = vadd.f32 %v165, %v171
    %173 = vset.pattern.permute.xlu0 4
    %174 = vperm.xlu0 %173, %v140
    %v175 = vpop.permute.xlu0 %174
    %v177 = vperm.slane %v141, 4
    %v178 = vmul.f32 %v175, %v177
    %v179 = vadd.f32 %v172, %v178
    %180 = vset.pattern.permute.xlu0 5
    %181 = vperm.xlu0 %180, %v140
    %v182 = vpop.permute.xlu0 %181
    %v184 = vperm.slane %v141, 5
    %v185 = vmul.f32 %v182, %v184
    %v186 = vadd.f32 %v179, %v185
    %187 = vset.pattern.permute.xlu0 6
    %188 = vperm.xlu0 %187, %v140
    %v189 = vpop.permute.xlu0 %188
    %v191 = vperm.slane %v141, 6
    %v192 = vmul.f32 %v189, %v191
    %v193 = vadd.f32 %v186, %v192
    %194 = vset.pattern.permute.xlu0 7
    %195 = vperm.xlu0 %194, %v140
    %v196 = vpop.permute.xlu0 %195
    %v198 = vperm.slane %v141, 7
    %v199 = vmul.f32 %v196, %v198
    %v200 = vadd.f32 %v193, %v199
    %201 = vst [vmem:[#allocation5] sm:$0x3] %v200
    // Predicated region
    $region22: #{tpu_custom_call.1} parent=1 // pred_check
      _
    $region23: #{tpu_custom_call.1} parent=1 // pred_check_branch
      %203 = sbr.rel (0) target = $region25
    $region24: #{tpu_custom_call.1} parent=1 // pred_region
      %205 = vsyncadd [#allocation4], 0
      %s207 = sshll.u32 [#allocation5], 4
      %s208 = int_to_ptr.vmem [resolvable:$true] %s207
      %s209 = sshll.u32 %s4, 4
      %s210 = int_to_ptr.hbm [resolvable:$true] %s209
      %212 = dma.vmem_to_hbm [thread:$0]  %s208, 32, %s210, [#allocation4]
    $region25: #{tpu_custom_call.1} parent=1 // pred_fallthru
      _
    // Predicated region
    $region26: #{tpu_custom_call.1} parent=1 // pred_check
      _
    $region27: #{tpu_custom_call.1} parent=1 // pred_check_branch
      %214 = sbr.rel (0) target = $region29
    $region28: #{tpu_custom_call.1} parent=1 // pred_region
      %216 = dma.done [#allocation4], 32
    $region29: #{tpu_custom_call.1} parent=1 // pred_fallthru
      _
    %217 = vsyncpa [#allocation3], 1
    %218 = vsyncpa [#allocation4], 1

</llo_original>
